<compile_context>
chip_gen: v5e
topology: v5e:2x2
jax: 0.10.0
libtpu: 0.0.40
codegen_flags: <defaults>
</compile_context>

<pallas_src>
import jax
import jax.numpy as jnp
from jax.experimental import pallas as pl
from jax.experimental.pallas import tpu as pltpu


def _combine_loss_kernel(w_ref, loss1_ref, loss2_ref, out_ref):
    # w_ref is a (1, 1) f32 scalar in SMEM: weight = sigmoid(beta), precomputed.
    w = w_ref[0, 0]
    out_ref[...] = (w * loss1_ref[...] + (1.0 - w) * loss2_ref[...]).astype(out_ref.dtype)


def combine_loss(beta, loss1, loss2, *, block_rows=512, lane_width=1024,
                 min_pallas_elems=65536):
    """Pallas implementation of CombineLoss.forward.

    beta  : scalar (float32 parameter)
    loss1 : any shape
    loss2 : same shape as loss1
    """
    assert loss1.shape == loss2.shape, "loss1/loss2 must share a shape"
    assert lane_width % 128 == 0

    out_dtype = jnp.result_type(loss1.dtype, loss2.dtype, jnp.float32)
    # Hoist the transcendental: computed once on a scalar, not per grid step.
    weight = jax.nn.sigmoid(jnp.asarray(beta, jnp.float32))

    n = int(loss1.size)
    if n == 0:
        return jnp.zeros(loss1.shape, out_dtype)

    # Fast path: for tiny loss maps the pallas_call fixed launch/pipeline
    # overhead dwarfs the HBM traffic; plain XLA fusion is strictly faster.
    if n < min_pallas_elems:
        return (weight * loss1.astype(jnp.float32)
                + (1.0 - weight) * loss2.astype(jnp.float32)).astype(out_dtype)

    # ---- lane-dense flatten + tile --------------------------------------
    C = lane_width
    rows = -(-n // C)                       # ceil
    br = min(block_rows, rows)
    if rows > br:
        # Round rows up to a multiple of the block so every tile is full
        # (no masked partial stores on the tail block).
        rows_padded = -(-rows // br) * br
    else:
        rows_padded = rows                  # single full-extent block
    padded_n = rows_padded * C

    l1 = loss1.reshape(-1)
    l2 = loss2.reshape(-1)
    if padded_n != n:
        l1 = jnp.pad(l1, (0, padded_n - n))
        l2 = jnp.pad(l2, (0, padded_n - n))
    l1 = l1.reshape(rows_padded, C)
    l2 = l2.reshape(rows_padded, C)

    w_smem = weight.reshape(1, 1)

    grid = (rows_padded // br,)
    itemsize = jnp.dtype(out_dtype).itemsize
    cost = pl.CostEstimate(flops=3 * padded_n,
                           transcendentals=0,
                           bytes_accessed=3 * padded_n * itemsize)

    out2d = pl.pallas_call(
        _combine_loss_kernel,
        out_shape=jax.ShapeDtypeStruct((rows_padded, C), out_dtype),
        grid_spec=pltpu.PrefetchScalarGridSpec(
            num_scalar_prefetch=0,
            grid=grid,
            in_specs=[
                # precomputed weight: same (1,1) SMEM block for every grid step
                pl.BlockSpec((1, 1), lambda i: (0, 0), memory_space=pltpu.SMEM),
                pl.BlockSpec((br, C), lambda i: (i, 0)),
                pl.BlockSpec((br, C), lambda i: (i, 0)),
            ],
            out_specs=pl.BlockSpec((br, C), lambda i: (i, 0)),
        ),
        compiler_params=pltpu.CompilerParams(
            dimension_semantics=("parallel",),
            # 3 operands x 2 buffers x 2 MiB = 12 MiB; 32 MiB scoped is safe on
            # v5e/v6e (128 MiB physical) and v7x (64 MiB physical per TC).
            vmem_limit_bytes=32 * 1024 * 1024,
        ),
        cost_estimate=cost,
    )(w_smem, l1, l2)

    out = out2d.reshape(-1)
    if padded_n != n:
        out = out[:n]
    return out.reshape(loss1.shape)


if __name__ == "__main__":
    key = jax.random.PRNGKey(0)
    k1, k2, k3, k4 = jax.random.split(key, 4)

    # Deterministic parameter init, matching nn.Parameter(torch.tensor(1.0))
    beta = jnp.float32(1.0)
    w = jax.nn.sigmoid(beta)

    # (1) Pallas path: small but non-aligned loss map; exercises the lane-dense
    #     flatten + padding + full-tile store path (forced past the fast path).
    loss1 = jax.random.normal(k1, (200, 333), dtype=jnp.float32)
    loss2 = jax.random.normal(k2, (200, 333), dtype=jnp.float32)
    out = jax.block_until_ready(combine_loss(beta, loss1, loss2, min_pallas_elems=0))
    ref = w * loss1 + (1.0 - w) * loss2
    assert out.shape == loss1.shape
    assert jnp.allclose(out, ref, atol=1e-6, rtol=1e-6), "Pallas path mismatch"

    # (2) Fast path: tiny loss map (launch overhead would dominate).
    s1 = jax.random.normal(k3, (8, 128), dtype=jnp.float32)
    s2 = jax.random.normal(k4, (8, 128), dtype=jnp.float32)
    out_small = jax.block_until_ready(combine_loss(beta, s1, s2))
    ref_small = w * s1 + (1.0 - w) * s2
    assert jnp.allclose(out_small, ref_small, atol=1e-6, rtol=1e-6), "fast path mismatch"

    print("KERNEL_OK")
</pallas_src>

<mosaic_0001>
module attributes {stable_mosaic.version = 11 : i64} {
  func.func @_combine_loss_kernel(%arg0: i32, %arg1: memref<1x1xf32, #tpu.memory_space<smem>>, %arg2: memref<66x1024xf32, #tpu.memory_space<vmem>>, %arg3: memref<66x1024xf32, #tpu.memory_space<vmem>>, %arg4: memref<66x1024xf32, #tpu.memory_space<vmem>>) attributes {dimension_semantics = [#tpu.dimension_semantics<parallel>], iteration_bounds = array<i64: 1>, scalar_prefetch = 0 : i64, scratch_operands = 0 : i64, tpu.core_type = #tpu.core_type<tc>, window_params = [{transform_indices = @transform_0, window_bounds = array<i64: 1, 1>}, {transform_indices = @transform_1, window_bounds = array<i64: 66, 1024>}, {transform_indices = @transform_2, window_bounds = array<i64: 66, 1024>}, {transform_indices = @transform_3, window_bounds = array<i64: 66, 1024>}]} {
    %c0 = arith.constant 0 : index
    %c0_0 = arith.constant 0 : index
    %0 = memref.load %arg1[%c0, %c0_0] : memref<1x1xf32, #tpu.memory_space<smem>>
    %c0_1 = arith.constant 0 : index
    %c0_2 = arith.constant 0 : index
    %1 = vector.load %arg2[%c0_1, %c0_2] : memref<66x1024xf32, #tpu.memory_space<vmem>>, vector<66x1024xf32>
    %2 = vector.broadcast %0 : f32 to vector<66x1024xf32>
    %3 = arith.mulf %2, %1 : vector<66x1024xf32>
    %cst = arith.constant 1.000000e+00 : f32
    %4 = arith.subf %cst, %0 : f32
    %c0_3 = arith.constant 0 : index
    %c0_4 = arith.constant 0 : index
    %5 = vector.load %arg3[%c0_3, %c0_4] : memref<66x1024xf32, #tpu.memory_space<vmem>>, vector<66x1024xf32>
    %6 = vector.broadcast %4 : f32 to vector<66x1024xf32>
    %7 = arith.mulf %6, %5 : vector<66x1024xf32>
    %8 = arith.addf %3, %7 : vector<66x1024xf32>
    %c0_5 = arith.constant 0 : index
    %c0_6 = arith.constant 0 : index
    %9 = vector.load %arg4[%c0_5, %c0_6] : memref<66x1024xf32, #tpu.memory_space<vmem>>, vector<66x1024xf32>
    tpu.vector_store %arg4[%c0_5, %c0_6], %8 {strides = array<i32>} : memref<66x1024xf32, #tpu.memory_space<vmem>>, vector<66x1024xf32>,
    return
  }
  func.func @transform_0(%arg0: i32) -> (i32, i32) {
    %c0_i32 = arith.constant 0 : i32
    %c0_i32_0 = arith.constant 0 : i32
    %c0_i32_1 = arith.constant 0 : i32
    return %c0_i32, %c0_i32_0 : i32, i32
  }
  func.func @transform_1(%arg0: i32) -> (i32, i32) {
    %c0_i32 = arith.constant 0 : i32
    %c0_i32_0 = arith.constant 0 : i32
    return %arg0, %c0_i32 : i32, i32
  }
  func.func @transform_2(%arg0: i32) -> (i32, i32) {
    %c0_i32 = arith.constant 0 : i32
    %c0_i32_0 = arith.constant 0 : i32
    return %arg0, %c0_i32 : i32, i32
  }
  func.func @transform_3(%arg0: i32) -> (i32, i32) {
    %c0_i32 = arith.constant 0 : i32
    %c0_i32_0 = arith.constant 0 : i32
    return %arg0, %c0_i32 : i32, i32
  }
}

</mosaic_0001>

<llo_original>
// kernel: tpu_custom_call.1
$region0: #{tpu_custom_call.1}
  #allocation0 [shape = 'u32[]', space=smem, size = 0x4, offset = 0x4, fixed_abs, tag = 'smem constant byte address 0x4 - core index']
  #allocation1 [shape = 'u32[72,128]{1,0:T(1,128)}', space=vmem, size = 0x9000, scoped, tag = 'internal scratch']
  #allocation2 [shape = 'f32[1,1]{1,0:T(1,128)S(6)}', space=smem, size = 0x200, scoped, tag = 'scoped memory for tpu_custom_call.1']
  %s0 = inlined_call_operand.<no memory space> [shape: f32[1,1], index: 0, kind: input, shape index: {}]
  %s1 = inlined_call_operand.hbm [shape: f32[66,1024], index: 1, kind: input, shape index: {}]
  %s2 = inlined_call_operand.hbm [shape: f32[66,1024], index: 2, kind: input, shape index: {}]
  %s3 = inlined_call_operand.hbm [shape: f32[66,1024], index: 3, kind: output, shape index: {}]
  %s4 = sld [smem:[#allocation0]]
  $region30: #{tpu_custom_call.1} parent=0
    _
  %s6 = ssub.s32 1, %s4
  %s7 = scalar_select 0, %s6, %s4
  %8 = sst [smem:[#allocation2]] %s0
  $region1: #{tpu_custom_call.1} parent=0
    #allocation3 [shape = 'u8[294912]{0}', space=vmem, size = 0x48000, scoped, tag = 'input window, operand 1, single buffered']
    #allocation4 [shape = 's32[1]{0}', space=sflag, size = 0x4, scoped, tag = 'scoped memory for tpu_custom_call.1']
    #allocation5 [shape = 's32[1]{0}', space=sflag, size = 0x4, scoped, tag = 'scoped memory for tpu_custom_call.1']
    #allocation6 [shape = 'u8[294912]{0}', space=vmem, size = 0x48000, scoped, tag = 'input window, operand 2, single buffered']
    #allocation7 [shape = 's32[1]{0}', space=sflag, size = 0x4, scoped, tag = 'scoped memory for tpu_custom_call.1']
    #allocation8 [shape = 'u8[294912]{0}', space=vmem, size = 0x48000, scoped, tag = 'output window, operand 0, single buffered']
    %9 = vsyncpa [#allocation4], 0
    %10 = vsyncpa [#allocation7], 0
    %11 = vsyncpa [#allocation5], 0
    // Predicated region
    $region2: #{tpu_custom_call.1} parent=1 // pred_check
      _
    $region3: #{tpu_custom_call.1} parent=1 // pred_check_branch
      %13 = sbr.rel (0) target = $region5
    $region4: #{tpu_custom_call.1} parent=1 // pred_region
      _
    $region5: #{tpu_custom_call.1} parent=1 // pred_fallthru
      _
    // Predicated region
    $region6: #{tpu_custom_call.1} parent=1 // pred_check
      _
    $region7: #{tpu_custom_call.1} parent=1 // pred_check_branch
      %15 = sbr.rel (0) target = $region9
    $region8: #{tpu_custom_call.1} parent=1 // pred_region
      %17 = vsyncadd [#allocation4], 0
      %s18 = sshll.u32 %s1, 4
      %s19 = int_to_ptr.hbm [resolvable:$true] %s18
      %s20 = sshll.u32 [#allocation3], 4
      %s21 = int_to_ptr.vmem [resolvable:$true] %s20
      %26 = dma.hbm_to_vmem [thread:$0]  %s19, 9216, %s21, [#allocation4], 1024, 1024, 64
    $region9: #{tpu_custom_call.1} parent=1 // pred_fallthru
      _
    // Predicated region
    $region10: #{tpu_custom_call.1} parent=1 // pred_check
      _
    $region11: #{tpu_custom_call.1} parent=1 // pred_check_branch
      %28 = sbr.rel (0) target = $region13
    $region12: #{tpu_custom_call.1} parent=1 // pred_region
      %30 = vsyncadd [#allocation7], 0
      %s31 = sshll.u32 %s2, 4
      %s32 = int_to_ptr.hbm [resolvable:$true] %s31
      %s33 = sshll.u32 [#allocation6], 4
      %s34 = int_to_ptr.vmem [resolvable:$true] %s33
      %39 = dma.hbm_to_vmem [thread:$0]  %s32, 9216, %s34, [#allocation7], 1024, 1024, 64
    $region13: #{tpu_custom_call.1} parent=1 // pred_fallthru
      _
    // Predicated region
    $region14: #{tpu_custom_call.1} parent=1 // pred_check
      _
    $region15: #{tpu_custom_call.1} parent=1 // pred_check_branch
      %41 = sbr.rel (0) target = $region17
    $region16: #{tpu_custom_call.1} parent=1 // pred_region
      %43 = dma.done [#allocation4], 9216
    $region17: #{tpu_custom_call.1} parent=1 // pred_fallthru
      _
    // Predicated region
    $region18: #{tpu_custom_call.1} parent=1 // pred_check
      _
    $region19: #{tpu_custom_call.1} parent=1 // pred_check_branch
      %45 = sbr.rel (0) target = $region21
    $region20: #{tpu_custom_call.1} parent=1 // pred_region
      %47 = dma.done [#allocation7], 9216
    $region21: #{tpu_custom_call.1} parent=1 // pred_fallthru
      _
    %s48 = sld [smem:[#allocation2]]
    %v49 = vld [vmem:[#allocation3] sm:$0xff]
    %v50 = vld [vmem:[#allocation3 + $0x8] sm:$0xff]
    %v51 = vld [vmem:[#allocation3 + $0x10] sm:$0xff]
    %v52 = vld [vmem:[#allocation3 + $0x18] sm:$0xff]
    %v53 = vld [vmem:[#allocation3 + $0x20] sm:$0xff]
    %v54 = vld [vmem:[#allocation3 + $0x28] sm:$0xff]
    %v55 = vld [vmem:[#allocation3 + $0x30] sm:$0xff]
    %v56 = vld [vmem:[#allocation3 + $0x38] sm:$0xff]
    %v57 = vld [vmem:[#allocation3 + $0x40] sm:$0xff]
    %v58 = vld [vmem:[#allocation3 + $0x48] sm:$0xff]
    %v59 = vld [vmem:[#allocation3 + $0x50] sm:$0xff]
    %v60 = vld [vmem:[#allocation3 + $0x58] sm:$0xff]
    %v61 = vld [vmem:[#allocation3 + $0x60] sm:$0xff]
    %v62 = vld [vmem:[#allocation3 + $0x68] sm:$0xff]
    %v63 = vld [vmem:[#allocation3 + $0x70] sm:$0xff]
    %v64 = vld [vmem:[#allocation3 + $0x78] sm:$0xff]
    %v65 = vld [vmem:[#allocation3 + $0x80] sm:$0xff]
    %v66 = vld [vmem:[#allocation3 + $0x88] sm:$0xff]
    %v67 = vld [vmem:[#allocation3 + $0x90] sm:$0xff]
    %v68 = vld [vmem:[#allocation3 + $0x98] sm:$0xff]
    %v69 = vld [vmem:[#allocation3 + $0xa0] sm:$0xff]
    %v70 = vld [vmem:[#allocation3 + $0xa8] sm:$0xff]
    %v71 = vld [vmem:[#allocation3 + $0xb0] sm:$0xff]
    %v72 = vld [vmem:[#allocation3 + $0xb8] sm:$0xff]
    %v73 = vld [vmem:[#allocation3 + $0xc0] sm:$0xff]
    %v74 = vld [vmem:[#allocation3 + $0xc8] sm:$0xff]
    %v75 = vld [vmem:[#allocation3 + $0xd0] sm:$0xff]
    %v76 = vld [vmem:[#allocation3 + $0xd8] sm:$0xff]
    %v77 = vld [vmem:[#allocation3 + $0xe0] sm:$0xff]
    %v78 = vld [vmem:[#allocation3 + $0xe8] sm:$0xff]
    %v79 = vld [vmem:[#allocation3 + $0xf0] sm:$0xff]
    %v80 = vld [vmem:[#allocation3 + $0xf8] sm:$0xff]
    %v81 = vld [vmem:[#allocation3 + $0x100] sm:$0xff]
    %v82 = vld [vmem:[#allocation3 + $0x108] sm:$0xff]
    %v83 = vld [vmem:[#allocation3 + $0x110] sm:$0xff]
    %v84 = vld [vmem:[#allocation3 + $0x118] sm:$0xff]
    %v85 = vld [vmem:[#allocation3 + $0x120] sm:$0xff]
    %v86 = vld [vmem:[#allocation3 + $0x128] sm:$0xff]
    %v87 = vld [vmem:[#allocation3 + $0x130] sm:$0xff]
    %v88 = vld [vmem:[#allocation3 + $0x138] sm:$0xff]
    %v89 = vld [vmem:[#allocation3 + $0x140] sm:$0xff]
    %v90 = vld [vmem:[#allocation3 + $0x148] sm:$0xff]
    %v91 = vld [vmem:[#allocation3 + $0x150] sm:$0xff]
    %v92 = vld [vmem:[#allocation3 + $0x158] sm:$0xff]
    %v93 = vld [vmem:[#allocation3 + $0x160] sm:$0xff]
    %v94 = vld [vmem:[#allocation3 + $0x168] sm:$0xff]
    %v95 = vld [vmem:[#allocation3 + $0x170] sm:$0xff]
    %v96 = vld [vmem:[#allocation3 + $0x178] sm:$0xff]
    %v97 = vld [vmem:[#allocation3 + $0x180] sm:$0xff]
    %v98 = vld [vmem:[#allocation3 + $0x188] sm:$0xff]
    %v99 = vld [vmem:[#allocation3 + $0x190] sm:$0xff]
    %v100 = vld [vmem:[#allocation3 + $0x198] sm:$0xff]
    %v101 = vld [vmem:[#allocation3 + $0x1a0] sm:$0xff]
    %v102 = vld [vmem:[#allocation3 + $0x1a8] sm:$0xff]
    %v103 = vld [vmem:[#allocation3 + $0x1b0] sm:$0xff]
    %v104 = vld [vmem:[#allocation3 + $0x1b8] sm:$0xff]
    %v105 = vld [vmem:[#allocation3 + $0x1c0] sm:$0xff]
    %v106 = vld [vmem:[#allocation3 + $0x1c8] sm:$0xff]
    %v107 = vld [vmem:[#allocation3 + $0x1d0] sm:$0xff]
    %v108 = vld [vmem:[#allocation3 + $0x1d8] sm:$0xff]
    %v109 = vld [vmem:[#allocation3 + $0x1e0] sm:$0xff]
    %v110 = vld [vmem:[#allocation3 + $0x1e8] sm:$0xff]
    %v111 = vld [vmem:[#allocation3 + $0x1f0] sm:$0xff]
    %v112 = vld [vmem:[#allocation3 + $0x1f8] sm:$0xff]
    %v113 = vld [vmem:[#allocation3 + $0x200] sm:$0x3]
    %v114 = vld [vmem:[#allocation3 + $0x208] sm:$0x3]
    %v115 = vld [vmem:[#allocation3 + $0x210] sm:$0x3]
    %v116 = vld [vmem:[#allocation3 + $0x218] sm:$0x3]
    %v117 = vld [vmem:[#allocation3 + $0x220] sm:$0x3]
    %v118 = vld [vmem:[#allocation3 + $0x228] sm:$0x3]
    %v119 = vld [vmem:[#allocation3 + $0x230] sm:$0x3]
    %v120 = vld [vmem:[#allocation3 + $0x238] sm:$0x3]
    %v121 = vstv %s48
    %v122 = vmul.f32 %v121, %v49
    %v123 = vmul.f32 %v121, %v50
    %v124 = vmul.f32 %v121, %v51
    %v125 = vmul.f32 %v121, %v52
    %v126 = vmul.f32 %v121, %v53
    %v127 = vmul.f32 %v121, %v54
    %v128 = vmul.f32 %v121, %v55
    %v129 = vmul.f32 %v121, %v56
    %v130 = vmul.f32 %v121, %v57
    %v131 = vmul.f32 %v121, %v58
    %v132 = vmul.f32 %v121, %v59
    %v133 = vmul.f32 %v121, %v60
    %v134 = vmul.f32 %v121, %v61
    %v135 = vmul.f32 %v121, %v62
    %v136 = vmul.f32 %v121, %v63
    %v137 = vmul.f32 %v121, %v64
    %v138 = vmul.f32 %v121, %v65
    %v139 = vmul.f32 %v121, %v66
    %v140 = vmul.f32 %v121, %v67
    %v141 = vmul.f32 %v121, %v68
    %v142 = vmul.f32 %v121, %v69
    %v143 = vmul.f32 %v121, %v70
    %v144 = vmul.f32 %v121, %v71
    %v145 = vmul.f32 %v121, %v72
    %v146 = vmul.f32 %v121, %v73
    %v147 = vmul.f32 %v121, %v74
    %v148 = vmul.f32 %v121, %v75
    %v149 = vmul.f32 %v121, %v76
    %v150 = vmul.f32 %v121, %v77
    %v151 = vmul.f32 %v121, %v78
    %v152 = vmul.f32 %v121, %v79
    %v153 = vmul.f32 %v121, %v80
    %v154 = vmul.f32 %v121, %v81
    %v155 = vmul.f32 %v121, %v82
    %v156 = vmul.f32 %v121, %v83
    %v157 = vmul.f32 %v121, %v84
    %v158 = vmul.f32 %v121, %v85
    %v159 = vmul.f32 %v121, %v86
    %v160 = vmul.f32 %v121, %v87
    %v161 = vmul.f32 %v121, %v88
    %v162 = vmul.f32 %v121, %v89
    %v163 = vmul.f32 %v121, %v90
    %v164 = vmul.f32 %v121, %v91
    %v165 = vmul.f32 %v121, %v92
    %v166 = vmul.f32 %v121, %v93
    %v167 = vmul.f32 %v121, %v94
    %v168 = vmul.f32 %v121, %v95
    %v169 = vmul.f32 %v121, %v96
    %v170 = vmul.f32 %v121, %v97
    %v171 = vmul.f32 %v121, %v98
    %v172 = vmul.f32 %v121, %v99
    %v173 = vmul.f32 %v121, %v100
    %v174 = vmul.f32 %v121, %v101
    %v175 = vmul.f32 %v121, %v102
    %v176 = vmul.f32 %v121, %v103
    %v177 = vmul.f32 %v121, %v104
    %v178 = vmul.f32 %v121, %v105
    %v179 = vmul.f32 %v121, %v106
    %v180 = vmul.f32 %v121, %v107
    %v181 = vmul.f32 %v121, %v108
    %v182 = vmul.f32 %v121, %v109
    %v183 = vmul.f32 %v121, %v110
    %v184 = vmul.f32 %v121, %v111
    %v185 = vmul.f32 %v121, %v112
    %v186 = vmul.f32 %v121, %v113
    %v187 = vmul.f32 %v121, %v114
    %v188 = vmul.f32 %v121, %v115
    %v189 = vmul.f32 %v121, %v116
    %v190 = vmul.f32 %v121, %v117
    %v191 = vmul.f32 %v121, %v118
    %v192 = vmul.f32 %v121, %v119
    %v193 = vmul.f32 %v121, %v120
    %s194 = ssub.f32 1.0, %s48
    %v195 = vld [vmem:[#allocation6] sm:$0xff]
    %v196 = vld [vmem:[#allocation6 + $0x8] sm:$0xff]
    %v197 = vld [vmem:[#allocation6 + $0x10] sm:$0xff]
    %v198 = vld [vmem:[#allocation6 + $0x18] sm:$0xff]
    %v199 = vld [vmem:[#allocation6 + $0x20] sm:$0xff]
    %v200 = vld [vmem:[#allocation6 + $0x28] sm:$0xff]
    %v201 = vld [vmem:[#allocation6 + $0x30] sm:$0xff]
    %v202 = vld [vmem:[#allocation6 + $0x38] sm:$0xff]
    %v203 = vld [vmem:[#allocation6 + $0x40] sm:$0xff]
    %v204 = vld [vmem:[#allocation6 + $0x48] sm:$0xff]
    %v205 = vld [vmem:[#allocation6 + $0x50] sm:$0xff]
    %v206 = vld [vmem:[#allocation6 + $0x58] sm:$0xff]
    %v207 = vld [vmem:[#allocation6 + $0x60] sm:$0xff]
    %v208 = vld [vmem:[#allocation6 + $0x68] sm:$0xff]
    %v209 = vld [vmem:[#allocation6 + $0x70] sm:$0xff]
    %v210 = vld [vmem:[#allocation6 + $0x78] sm:$0xff]
    %v211 = vld [vmem:[#allocation6 + $0x80] sm:$0xff]
    %v212 = vld [vmem:[#allocation6 + $0x88] sm:$0xff]
    %v213 = vld [vmem:[#allocation6 + $0x90] sm:$0xff]
    %v214 = vld [vmem:[#allocation6 + $0x98] sm:$0xff]
    %v215 = vld [vmem:[#allocation6 + $0xa0] sm:$0xff]
    %v216 = vld [vmem:[#allocation6 + $0xa8] sm:$0xff]
    %v217 = vld [vmem:[#allocation6 + $0xb0] sm:$0xff]
    %v218 = vld [vmem:[#allocation6 + $0xb8] sm:$0xff]
    %v219 = vld [vmem:[#allocation6 + $0xc0] sm:$0xff]
    %v220 = vld [vmem:[#allocation6 + $0xc8] sm:$0xff]
    %v221 = vld [vmem:[#allocation6 + $0xd0] sm:$0xff]
    %v222 = vld [vmem:[#allocation6 + $0xd8] sm:$0xff]
    %v223 = vld [vmem:[#allocation6 + $0xe0] sm:$0xff]
    %v224 = vld [vmem:[#allocation6 + $0xe8] sm:$0xff]
    %v225 = vld [vmem:[#allocation6 + $0xf0] sm:$0xff]
    %v226 = vld [vmem:[#allocation6 + $0xf8] sm:$0xff]
    %v227 = vld [vmem:[#allocation6 + $0x100] sm:$0xff]
    %v228 = vld [vmem:[#allocation6 + $0x108] sm:$0xff]
    %v229 = vld [vmem:[#allocation6 + $0x110] sm:$0xff]
    %v230 = vld [vmem:[#allocation6 + $0x118] sm:$0xff]
    %v231 = vld [vmem:[#allocation6 + $0x120] sm:$0xff]
    %v232 = vld [vmem:[#allocation6 + $0x128] sm:$0xff]
    %v233 = vld [vmem:[#allocation6 + $0x130] sm:$0xff]
    %v234 = vld [vmem:[#allocation6 + $0x138] sm:$0xff]
    %v235 = vld [vmem:[#allocation6 + $0x140] sm:$0xff]
    %v236 = vld [vmem:[#allocation6 + $0x148] sm:$0xff]
    %v237 = vld [vmem:[#allocation6 + $0x150] sm:$0xff]
    %v238 = vld [vmem:[#allocation6 + $0x158] sm:$0xff]
    %v239 = vld [vmem:[#allocation6 + $0x160] sm:$0xff]
    %v240 = vld [vmem:[#allocation6 + $0x168] sm:$0xff]
    %v241 = vld [vmem:[#allocation6 + $0x170] sm:$0xff]
    %v242 = vld [vmem:[#allocation6 + $0x178] sm:$0xff]
    %v243 = vld [vmem:[#allocation6 + $0x180] sm:$0xff]
    %v244 = vld [vmem:[#allocation6 + $0x188] sm:$0xff]
    %v245 = vld [vmem:[#allocation6 + $0x190] sm:$0xff]
    %v246 = vld [vmem:[#allocation6 + $0x198] sm:$0xff]
    %v247 = vld [vmem:[#allocation6 + $0x1a0] sm:$0xff]
    %v248 = vld [vmem:[#allocation6 + $0x1a8] sm:$0xff]
    %v249 = vld [vmem:[#allocation6 + $0x1b0] sm:$0xff]
    %v250 = vld [vmem:[#allocation6 + $0x1b8] sm:$0xff]
    %v251 = vld [vmem:[#allocation6 + $0x1c0] sm:$0xff]
    %v252 = vld [vmem:[#allocation6 + $0x1c8] sm:$0xff]
    %v253 = vld [vmem:[#allocation6 + $0x1d0] sm:$0xff]
    %v254 = vld [vmem:[#allocation6 + $0x1d8] sm:$0xff]
    %v255 = vld [vmem:[#allocation6 + $0x1e0] sm:$0xff]
    %v256 = vld [vmem:[#allocation6 + $0x1e8] sm:$0xff]
    %v257 = vld [vmem:[#allocation6 + $0x1f0] sm:$0xff]
    %v258 = vld [vmem:[#allocation6 + $0x1f8] sm:$0xff]
    %v259 = vld [vmem:[#allocation6 + $0x200] sm:$0x3]
    %v260 = vld [vmem:[#allocation6 + $0x208] sm:$0x3]
    %v261 = vld [vmem:[#allocation6 + $0x210] sm:$0x3]
    %v262 = vld [vmem:[#allocation6 + $0x218] sm:$0x3]
    %v263 = vld [vmem:[#allocation6 + $0x220] sm:$0x3]
    %v264 = vld [vmem:[#allocation6 + $0x228] sm:$0x3]
    %v265 = vld [vmem:[#allocation6 + $0x230] sm:$0x3]
    %v266 = vld [vmem:[#allocation6 + $0x238] sm:$0x3]
    %v267 = vstv %s194
    %v268 = vmul.f32 %v267, %v195
    %v269 = vmul.f32 %v267, %v196
    %v270 = vmul.f32 %v267, %v197
    %v271 = vmul.f32 %v267, %v198
    %v272 = vmul.f32 %v267, %v199
    %v273 = vmul.f32 %v267, %v200
    %v274 = vmul.f32 %v267, %v201
    %v275 = vmul.f32 %v267, %v202
    %v276 = vmul.f32 %v267, %v203
    %v277 = vmul.f32 %v267, %v204
    %v278 = vmul.f32 %v267, %v205
    %v279 = vmul.f32 %v267, %v206
    %v280 = vmul.f32 %v267, %v207
    %v281 = vmul.f32 %v267, %v208
    %v282 = vmul.f32 %v267, %v209
    %v283 = vmul.f32 %v267, %v210
    %v284 = vmul.f32 %v267, %v211
    %v285 = vmul.f32 %v267, %v212
    %v286 = vmul.f32 %v267, %v213
    %v287 = vmul.f32 %v267, %v214
    %v288 = vmul.f32 %v267, %v215
    %v289 = vmul.f32 %v267, %v216
    %v290 = vmul.f32 %v267, %v217
    %v291 = vmul.f32 %v267, %v218
    %v292 = vmul.f32 %v267, %v219
    %v293 = vmul.f32 %v267, %v220
    %v294 = vmul.f32 %v267, %v221
    %v295 = vmul.f32 %v267, %v222
    %v296 = vmul.f32 %v267, %v223
    %v297 = vmul.f32 %v267, %v224
    %v298 = vmul.f32 %v267, %v225
    %v299 = vmul.f32 %v267, %v226
    %v300 = vmul.f32 %v267, %v227
    %v301 = vmul.f32 %v267, %v228
    %v302 = vmul.f32 %v267, %v229
    %v303 = vmul.f32 %v267, %v230
    %v304 = vmul.f32 %v267, %v231
    %v305 = vmul.f32 %v267, %v232
    %v306 = vmul.f32 %v267, %v233
    %v307 = vmul.f32 %v267, %v234
    %v308 = vmul.f32 %v267, %v235
    %v309 = vmul.f32 %v267, %v236
    %v310 = vmul.f32 %v267, %v237
    %v311 = vmul.f32 %v267, %v238
    %v312 = vmul.f32 %v267, %v239
    %v313 = vmul.f32 %v267, %v240
    %v314 = vmul.f32 %v267, %v241
    %v315 = vmul.f32 %v267, %v242
    %v316 = vmul.f32 %v267, %v243
    %v317 = vmul.f32 %v267, %v244
    %v318 = vmul.f32 %v267, %v245
    %v319 = vmul.f32 %v267, %v246
    %v320 = vmul.f32 %v267, %v247
    %v321 = vmul.f32 %v267, %v248
    %v322 = vmul.f32 %v267, %v249
    %v323 = vmul.f32 %v267, %v250
    %v324 = vmul.f32 %v267, %v251
    %v325 = vmul.f32 %v267, %v252
    %v326 = vmul.f32 %v267, %v253
    %v327 = vmul.f32 %v267, %v254
    %v328 = vmul.f32 %v267, %v255
    %v329 = vmul.f32 %v267, %v256
    %v330 = vmul.f32 %v267, %v257
    %v331 = vmul.f32 %v267, %v258
    %v332 = vmul.f32 %v267, %v259
    %v333 = vmul.f32 %v267, %v260
    %v334 = vmul.f32 %v267, %v261
    %v335 = vmul.f32 %v267, %v262
    %v336 = vmul.f32 %v267, %v263
    %v337 = vmul.f32 %v267, %v264
    %v338 = vmul.f32 %v267, %v265
    %v339 = vmul.f32 %v267, %v266
    %v340 = vadd.f32 %v122, %v268
    %v341 = vadd.f32 %v123, %v269
    %v342 = vadd.f32 %v124, %v270
    %v343 = vadd.f32 %v125, %v271
    %v344 = vadd.f32 %v126, %v272
    %v345 = vadd.f32 %v127, %v273
    %v346 = vadd.f32 %v128, %v274
    %v347 = vadd.f32 %v129, %v275
    %v348 = vadd.f32 %v130, %v276
    %v349 = vadd.f32 %v131, %v277
    %v350 = vadd.f32 %v132, %v278
    %v351 = vadd.f32 %v133, %v279
    %v352 = vadd.f32 %v134, %v280
    %v353 = vadd.f32 %v135, %v281
    %v354 = vadd.f32 %v136, %v282
    %v355 = vadd.f32 %v137, %v283
    %v356 = vadd.f32 %v138, %v284
    %v357 = vadd.f32 %v139, %v285
    %v358 = vadd.f32 %v140, %v286
    %v359 = vadd.f32 %v141, %v287
    %v360 = vadd.f32 %v142, %v288
    %v361 = vadd.f32 %v143, %v289
    %v362 = vadd.f32 %v144, %v290
    %v363 = vadd.f32 %v145, %v291
    %v364 = vadd.f32 %v146, %v292
    %v365 = vadd.f32 %v147, %v293
    %v366 = vadd.f32 %v148, %v294
    %v367 = vadd.f32 %v149, %v295
    %v368 = vadd.f32 %v150, %v296
    %v369 = vadd.f32 %v151, %v297
    %v370 = vadd.f32 %v152, %v298
    %v371 = vadd.f32 %v153, %v299
    %v372 = vadd.f32 %v154, %v300
    %v373 = vadd.f32 %v155, %v301
    %v374 = vadd.f32 %v156, %v302
    %v375 = vadd.f32 %v157, %v303
    %v376 = vadd.f32 %v158, %v304
    %v377 = vadd.f32 %v159, %v305
    %v378 = vadd.f32 %v160, %v306
    %v379 = vadd.f32 %v161, %v307
    %v380 = vadd.f32 %v162, %v308
    %v381 = vadd.f32 %v163, %v309
    %v382 = vadd.f32 %v164, %v310
    %v383 = vadd.f32 %v165, %v311
    %v384 = vadd.f32 %v166, %v312
    %v385 = vadd.f32 %v167, %v313
    %v386 = vadd.f32 %v168, %v314
    %v387 = vadd.f32 %v169, %v315
    %v388 = vadd.f32 %v170, %v316
    %v389 = vadd.f32 %v171, %v317
    %v390 = vadd.f32 %v172, %v318
    %v391 = vadd.f32 %v173, %v319
    %v392 = vadd.f32 %v174, %v320
    %v393 = vadd.f32 %v175, %v321
    %v394 = vadd.f32 %v176, %v322
    %v395 = vadd.f32 %v177, %v323
    %v396 = vadd.f32 %v178, %v324
    %v397 = vadd.f32 %v179, %v325
    %v398 = vadd.f32 %v180, %v326
    %v399 = vadd.f32 %v181, %v327
    %v400 = vadd.f32 %v182, %v328
    %v401 = vadd.f32 %v183, %v329
    %v402 = vadd.f32 %v184, %v330
    %v403 = vadd.f32 %v185, %v331
    %v404 = vadd.f32 %v186, %v332
    %v405 = vadd.f32 %v187, %v333
    %v406 = vadd.f32 %v188, %v334
    %v407 = vadd.f32 %v189, %v335
    %v408 = vadd.f32 %v190, %v336
    %v409 = vadd.f32 %v191, %v337
    %v410 = vadd.f32 %v192, %v338
    %v411 = vadd.f32 %v193, %v339
    %412 = vst [vmem:[#allocation8] sm:$0xff] %v340
    %413 = vst [vmem:[#allocation8 + $0x8] sm:$0xff] %v341
    %414 = vst [vmem:[#allocation8 + $0x10] sm:$0xff] %v342
    %415 = vst [vmem:[#allocation8 + $0x18] sm:$0xff] %v343
    %416 = vst [vmem:[#allocation8 + $0x20] sm:$0xff] %v344
    %417 = vst [vmem:[#allocation8 + $0x28] sm:$0xff] %v345
    %418 = vst [vmem:[#allocation8 + $0x30] sm:$0xff] %v346
    %419 = vst [vmem:[#allocation8 + $0x38] sm:$0xff] %v347
    %420 = vst [vmem:[#allocation8 + $0x40] sm:$0xff] %v348
    %421 = vst [vmem:[#allocation8 + $0x48] sm:$0xff] %v349
    %422 = vst [vmem:[#allocation8 + $0x50] sm:$0xff] %v350
    %423 = vst [vmem:[#allocation8 + $0x58] sm:$0xff] %v351
    %424 = vst [vmem:[#allocation8 + $0x60] sm:$0xff] %v352
    %425 = vst [vmem:[#allocation8 + $0x68] sm:$0xff] %v353
    %426 = vst [vmem:[#allocation8 + $0x70] sm:$0xff] %v354
    %427 = vst [vmem:[#allocation8 + $0x78] sm:$0xff] %v355
    %428 = vst [vmem:[#allocation8 + $0x80] sm:$0xff] %v356
    %429 = vst [vmem:[#allocation8 + $0x88] sm:$0xff] %v357
    %430 = vst [vmem:[#allocation8 + $0x90] sm:$0xff] %v358
    %431 = vst [vmem:[#allocation8 + $0x98] sm:$0xff] %v359
    %432 = vst [vmem:[#allocation8 + $0xa0] sm:$0xff] %v360
    %433 = vst [vmem:[#allocation8 + $0xa8] sm:$0xff] %v361
    %434 = vst [vmem:[#allocation8 + $0xb0] sm:$0xff] %v362
    %435 = vst [vmem:[#allocation8 + $0xb8] sm:$0xff] %v363
    %436 = vst [vmem:[#allocation8 + $0xc0] sm:$0xff] %v364
    %437 = vst [vmem:[#allocation8 + $0xc8] sm:$0xff] %v365
    %438 = vst [vmem:[#allocation8 + $0xd0] sm:$0xff] %v366
    %439 = vst [vmem:[#allocation8 + $0xd8] sm:$0xff] %v367
    %440 = vst [vmem:[#allocation8 + $0xe0] sm:$0xff] %v368
    %441 = vst [vmem:[#allocation8 + $0xe8] sm:$0xff] %v369
    %442 = vst [vmem:[#allocation8 + $0xf0] sm:$0xff] %v370
    %443 = vst [vmem:[#allocation8 + $0xf8] sm:$0xff] %v371
    %444 = vst [vmem:[#allocation8 + $0x100] sm:$0xff] %v372
    %445 = vst [vmem:[#allocation8 + $0x108] sm:$0xff] %v373
    %446 = vst [vmem:[#allocation8 + $0x110] sm:$0xff] %v374
    %447 = vst [vmem:[#allocation8 + $0x118] sm:$0xff] %v375
    %448 = vst [vmem:[#allocation8 + $0x120] sm:$0xff] %v376
    %449 = vst [vmem:[#allocation8 + $0x128] sm:$0xff] %v377
    %450 = vst [vmem:[#allocation8 + $0x130] sm:$0xff] %v378
    %451 = vst [vmem:[#allocation8 + $0x138] sm:$0xff] %v379
    %452 = vst [vmem:[#allocation8 + $0x140] sm:$0xff] %v380
    %453 = vst [vmem:[#allocation8 + $0x148] sm:$0xff] %v381
    %454 = vst [vmem:[#allocation8 + $0x150] sm:$0xff] %v382
    %455 = vst [vmem:[#allocation8 + $0x158] sm:$0xff] %v383
    %456 = vst [vmem:[#allocation8 + $0x160] sm:$0xff] %v384
    %457 = vst [vmem:[#allocation8 + $0x168] sm:$0xff] %v385
    %458 = vst [vmem:[#allocation8 + $0x170] sm:$0xff] %v386
    %459 = vst [vmem:[#allocation8 + $0x178] sm:$0xff] %v387
    %460 = vst [vmem:[#allocation8 + $0x180] sm:$0xff] %v388
    %461 = vst [vmem:[#allocation8 + $0x188] sm:$0xff] %v389
    %462 = vst [vmem:[#allocation8 + $0x190] sm:$0xff] %v390
    %463 = vst [vmem:[#allocation8 + $0x198] sm:$0xff] %v391
    %464 = vst [vmem:[#allocation8 + $0x1a0] sm:$0xff] %v392
    %465 = vst [vmem:[#allocation8 + $0x1a8] sm:$0xff] %v393
    %466 = vst [vmem:[#allocation8 + $0x1b0] sm:$0xff] %v394
    %467 = vst [vmem:[#allocation8 + $0x1b8] sm:$0xff] %v395
    %468 = vst [vmem:[#allocation8 + $0x1c0] sm:$0xff] %v396
    %469 = vst [vmem:[#allocation8 + $0x1c8] sm:$0xff] %v397
    %470 = vst [vmem:[#allocation8 + $0x1d0] sm:$0xff] %v398
    %471 = vst [vmem:[#allocation8 + $0x1d8] sm:$0xff] %v399
    %472 = vst [vmem:[#allocation8 + $0x1e0] sm:$0xff] %v400
    %473 = vst [vmem:[#allocation8 + $0x1e8] sm:$0xff] %v401
    %474 = vst [vmem:[#allocation8 + $0x1f0] sm:$0xff] %v402
    %475 = vst [vmem:[#allocation8 + $0x1f8] sm:$0xff] %v403
    %476 = vst [vmem:[#allocation8 + $0x200] sm:$0x3] %v404
    %477 = vst [vmem:[#allocation8 + $0x208] sm:$0x3] %v405
    %478 = vst [vmem:[#allocation8 + $0x210] sm:$0x3] %v406
    %479 = vst [vmem:[#allocation8 + $0x218] sm:$0x3] %v407
    %480 = vst [vmem:[#allocation8 + $0x220] sm:$0x3] %v408
    %481 = vst [vmem:[#allocation8 + $0x228] sm:$0x3] %v409
    %482 = vst [vmem:[#allocation8 + $0x230] sm:$0x3] %v410
    %483 = vst [vmem:[#allocation8 + $0x238] sm:$0x3] %v411
    // Predicated region
    $region22: #{tpu_custom_call.1} parent=1 // pred_check
      _
    $region23: #{tpu_custom_call.1} parent=1 // pred_check_branch
      %485 = sbr.rel (0) target = $region25
    $region24: #{tpu_custom_call.1} parent=1 // pred_region
      %487 = vsyncadd [#allocation5], 0
      %s488 = sshll.u32 [#allocation8], 4
      %s489 = int_to_ptr.vmem [resolvable:$true] %s488
      %s490 = sshll.u32 %s3, 4
      %s491 = int_to_ptr.hbm [resolvable:$true] %s490
      %496 = dma.vmem_to_hbm [thread:$0]  %s489, 9216, %s491, [#allocation5], 1024, 1024, 64
    $region25: #{tpu_custom_call.1} parent=1 // pred_fallthru
      _
    // Predicated region
    $region26: #{tpu_custom_call.1} parent=1 // pred_check
      _
    $region27: #{tpu_custom_call.1} parent=1 // pred_check_branch
      %498 = sbr.rel (0) target = $region29
    $region28: #{tpu_custom_call.1} parent=1 // pred_region
      %500 = dma.done [#allocation5], 9216
    $region29: #{tpu_custom_call.1} parent=1 // pred_fallthru
      _
    %501 = vsyncpa [#allocation4], 1
    %502 = vsyncpa [#allocation7], 1
    %503 = vsyncpa [#allocation5], 1

</llo_original>
